<compile_context>
chip_gen: v7x
topology: tpu7x:2x2x1
jax: 0.10.0
libtpu: 0.0.40
codegen_flags: <defaults>
</compile_context>

<pallas_src>
import jax
import jax.numpy as jnp
from jax.experimental import pallas as pl
from jax.experimental.pallas import tpu as pltpu


def _hswish_kernel(x_ref, o_ref):
    x = x_ref[...]
    # x * relu6(x + 3) / 6  -- exact PyTorch Hswish semantics (clamp to [0, 6]).
    o_ref[...] = x * jnp.clip(x + 3.0, 0.0, 6.0) / 6.0


_LANES = 128
# Minimum sublane multiple per element width (f32: 8, bf16/f16: 16, int8/fp8: 32).
_SUBLANE_MULT = {4: 8, 2: 16, 1: 32}


def hswish(x, *, block_bytes=2 * 1024 * 1024, donate_input=False):
    """Elementwise hard-swish on an array of any shape (float dtypes).

    The tensor is streamed through VMEM in ~`block_bytes` lane-dense blocks.
    Set `donate_input=True` only when the activation buffer may be reused
    (aliases input 0 to output 0; otherwise XLA inserts a protective copy).
    """
    orig_shape = x.shape
    dtype = x.dtype
    n = x.size
    if n == 0:
        return x

    itemsize = jnp.dtype(dtype).itemsize
    sublane = _SUBLANE_MULT.get(itemsize, 8)

    flat = x.reshape(-1)
    pad = (-n) % _LANES
    if pad:
        # Rare ragged case (numel not a multiple of 128): single pad pass.
        # NCHW conv activations essentially always take the pad-free path.
        flat = jnp.pad(flat, (0, pad))
    rows = flat.shape[0] // _LANES
    x2d = flat.reshape(rows, _LANES)

    # Block rows: target `block_bytes` per block, aligned to the sublane
    # packing multiple, and never (much) larger than the array itself.
    tr = max(sublane, (block_bytes // (_LANES * itemsize)) // sublane * sublane)
    rows_aligned = -(-rows // sublane) * sublane
    tr = min(tr, rows_aligned)

    grid = (pl.cdiv(rows, tr),)  # last block may overhang: reads padded, stores masked

    out2d = pl.pallas_call(
        _hswish_kernel,
        out_shape=jax.ShapeDtypeStruct((rows, _LANES), dtype),
        grid_spec=pltpu.PrefetchScalarGridSpec(
            num_scalar_prefetch=0,
            grid=grid,
            in_specs=[pl.BlockSpec((tr, _LANES), lambda i: (i, 0))],
            out_specs=pl.BlockSpec((tr, _LANES), lambda i: (i, 0)),
        ),
        compiler_params=pltpu.CompilerParams(
            dimension_semantics=("parallel",)),  # lets v7x shard the grid over its 2 TCs
        input_output_aliases={0: 0} if donate_input else {},
    )(x2d)

    if pad:
        out2d = out2d.reshape(-1)[:n]
    return out2d.reshape(orig_shape)


def hswish_ref(x):
    return x * jnp.clip(x + 3.0, 0.0, 6.0) / 6.0


if __name__ == "__main__":
    key = jax.random.PRNGKey(0)

    # NCHW, consistent with MobileNetV3 conv activations (pad-free path).
    x = jax.random.normal(key, (2, 4, 16, 16), dtype=jnp.float32) * 4.0
    out = jax.block_until_ready(hswish(x))
    ref = hswish_ref(x)
    assert out.shape == x.shape and out.dtype == x.dtype
    assert jnp.allclose(out, ref, atol=1e-6, rtol=1e-6), "mismatch vs reference (aligned)"

    # Ragged size: exercises the cdiv grid with a masked last block + pad path.
    x2 = jax.random.normal(jax.random.PRNGKey(1), (3, 5, 7, 11), dtype=jnp.float32) * 4.0
    out2 = jax.block_until_ready(hswish(x2, block_bytes=8 * _LANES * 4))
    assert jnp.allclose(out2, hswish_ref(x2), atol=1e-6, rtol=1e-6), "mismatch vs reference (ragged)"

    print("KERNEL_OK")
</pallas_src>

<mosaic_0001>
module attributes {stable_mosaic.version = 11 : i64} {
  func.func @_hswish_kernel(%arg0: i32, %arg1: memref<16x128xf32, #tpu.memory_space<vmem>>, %arg2: memref<16x128xf32, #tpu.memory_space<vmem>>) attributes {dimension_semantics = [#tpu.dimension_semantics<parallel>], iteration_bounds = array<i64: 1>, scalar_prefetch = 0 : i64, scratch_operands = 0 : i64, tpu.core_type = #tpu.core_type<tc>, window_params = [{transform_indices = @transform_0, window_bounds = array<i64: 16, 128>}, {transform_indices = @transform_1, window_bounds = array<i64: 16, 128>}]} {
    %c0 = arith.constant 0 : index
    %c0_0 = arith.constant 0 : index
    %0 = vector.load %arg1[%c0, %c0_0] : memref<16x128xf32, #tpu.memory_space<vmem>>, vector<16x128xf32>
    %cst = arith.constant 3.000000e+00 : f32
    %1 = vector.broadcast %cst : f32 to vector<16x128xf32>
    %2 = arith.addf %0, %1 : vector<16x128xf32>
    %cst_1 = arith.constant 0.000000e+00 : f32
    %cst_2 = arith.constant 6.000000e+00 : f32
    %3 = vector.broadcast %cst_1 : f32 to vector<16x128xf32>
    %4 = arith.maximumf %3, %2 : vector<16x128xf32>
    %5 = vector.broadcast %cst_2 : f32 to vector<16x128xf32>
    %6 = arith.minimumf %5, %4 : vector<16x128xf32>
    %7 = arith.mulf %0, %6 : vector<16x128xf32>
    %cst_3 = arith.constant 6.000000e+00 : f32
    %8 = vector.broadcast %cst_3 : f32 to vector<16x128xf32>
    %9 = arith.divf %7, %8 : vector<16x128xf32>
    %c0_4 = arith.constant 0 : index
    %c0_5 = arith.constant 0 : index
    %10 = vector.load %arg2[%c0_4, %c0_5] : memref<16x128xf32, #tpu.memory_space<vmem>>, vector<16x128xf32>
    tpu.vector_store %arg2[%c0_4, %c0_5], %9 {strides = array<i32>} : memref<16x128xf32, #tpu.memory_space<vmem>>, vector<16x128xf32>,
    return
  }
  func.func @transform_0(%arg0: i32) -> (i32, i32) {
    %c0_i32 = arith.constant 0 : i32
    %c0_i32_0 = arith.constant 0 : i32
    return %arg0, %c0_i32 : i32, i32
  }
  func.func @transform_1(%arg0: i32) -> (i32, i32) {
    %c0_i32 = arith.constant 0 : i32
    %c0_i32_0 = arith.constant 0 : i32
    return %arg0, %c0_i32 : i32, i32
  }
}

</mosaic_0001>

<llo_original>
// kernel: tpu_custom_call.1
$region0: #{tpu_custom_call.1}
  #allocation0 [shape = 'u32[]', space=smem, size = 0x4, offset = 0x4, fixed_abs, tag = 'smem constant byte address 0x4 - core index']
  #allocation1 [shape = 'u32[144,128]{1,0:T(1,128)}', space=vmem, size = 0x12000, scoped, tag = 'internal scratch']
  %s0 = inlined_call_operand.hbm [shape: f32[16,128], index: 0, kind: input, shape index: {}]
  %s1 = inlined_call_operand.hbm [shape: f32[16,128], index: 1, kind: output, shape index: {}]
  %s2 = sld [smem:[#allocation0]]
  $region18: #{tpu_custom_call.1} parent=0
    _
  %s4 = ssub.s32 1, %s2
  %s5 = scalar_select 0, %s4, %s2
  $region1: #{tpu_custom_call.1} parent=0
    #allocation2 [shape = 'u8[8192]{0}', space=vmem, size = 0x2000, scoped, tag = 'input window, operand 0, single buffered']
    #allocation3 [shape = 's32[1]{0}', space=sflag, size = 0x4, scoped, tag = 'scoped memory for tpu_custom_call.1']
    #allocation4 [shape = 's32[1]{0}', space=sflag, size = 0x4, scoped, tag = 'scoped memory for tpu_custom_call.1']
    #allocation5 [shape = 'u8[8192]{0}', space=vmem, size = 0x2000, scoped, tag = 'output window, operand 0, single buffered']
    %6 = vsyncpa [#allocation3], 0
    %7 = vsyncpa [#allocation4], 0
    // Predicated region
    $region2: #{tpu_custom_call.1} parent=1 // pred_check
      _
    $region3: #{tpu_custom_call.1} parent=1 // pred_check_branch
      %9 = sbr.rel (0) target = $region5
    $region4: #{tpu_custom_call.1} parent=1 // pred_region
      %s11 = ssub.s32 256, 256
      %12 = vsyncadd [#allocation3], %s11
      %s13 = sshll.u32 [#allocation2], 4
      %s14 = int_to_ptr.vmem [resolvable:$true] %s13
      %19 = dma.hbm_to_vmem [thread:$0]  %s0, 256, %s14, [#allocation3], 128, 128, 8
    $region5: #{tpu_custom_call.1} parent=1 // pred_fallthru
      _
    // Predicated region
    $region6: #{tpu_custom_call.1} parent=1 // pred_check
      _
    $region7: #{tpu_custom_call.1} parent=1 // pred_check_branch
      %21 = sbr.rel (0) target = $region9
    $region8: #{tpu_custom_call.1} parent=1 // pred_region
      %22 = dma.done [#allocation3], 256
    $region9: #{tpu_custom_call.1} parent=1 // pred_fallthru
      _
    %v23 = vld [vmem:[#allocation2] sm:$0xff]
    %v24 = vld [vmem:[#allocation2 + $0x8] sm:$0xff]
    %v25 = vadd.f32 %v23, 3.0
    %v26 = vadd.f32 %v24, 3.0
    %v27 = vmax.f32 %v25, 0.0
    %v28 = vmax.f32 %v26, 0.0
    %v29 = vmin.f32 %v27, 6.0
    %v30 = vmin.f32 %v28, 6.0
    %v31 = vmul.f32 %v23, %v29
    %v32 = vmul.f32 %v24, %v30
    %v33 = vrcp.pop 6.0
    %v34 = vmul.f32 %v31, %v33
    %v35 = vmul.f32 %v32, %v33
    %36 = vst [vmem:[#allocation5] sm:$0xff] %v34
    %37 = vst [vmem:[#allocation5 + $0x8] sm:$0xff] %v35
    // Predicated region
    $region10: #{tpu_custom_call.1} parent=1 // pred_check
      _
    $region11: #{tpu_custom_call.1} parent=1 // pred_check_branch
      %39 = sbr.rel (0) target = $region13
    $region12: #{tpu_custom_call.1} parent=1 // pred_region
      %s41 = ssub.s32 256, 256
      %42 = vsyncadd [#allocation4], %s41
      %s43 = sshll.u32 [#allocation5], 4
      %s44 = int_to_ptr.vmem [resolvable:$true] %s43
      %49 = dma.vmem_to_hbm [thread:$0]  %s44, 256, %s1, [#allocation4], 128, 128, 8
    $region13: #{tpu_custom_call.1} parent=1 // pred_fallthru
      _
    // Predicated region
    $region14: #{tpu_custom_call.1} parent=1 // pred_check
      _
    $region15: #{tpu_custom_call.1} parent=1 // pred_check_branch
      %51 = sbr.rel (0) target = $region17
    $region16: #{tpu_custom_call.1} parent=1 // pred_region
      %52 = dma.done [#allocation4], 256
    $region17: #{tpu_custom_call.1} parent=1 // pred_fallthru
      _
    %53 = vsyncpa [#allocation3], 1
    %54 = vsyncpa [#allocation4], 1

</llo_original>
